<compile_context>
chip_gen: v7x
topology: tpu7x:2x2x1
jax: 0.10.0
libtpu: 0.0.40
codegen_flags: <defaults>
</compile_context>

<pallas_src>
import functools
import numpy as np
import jax
import jax.numpy as jnp
from jax.experimental import pallas as pl
from jax.experimental.pallas import tpu as pltpu


# ---------------------------------------------------------------------------
# Kernel: per-token logsumexp + argmax + label-logit gather over vocab tiles
# ---------------------------------------------------------------------------
def _lse_argmax_kernel(labels_ref, logits_ref, lse_ref, pred_ref, gold_ref,
                       m_sc, l_sc, idx_sc, g_sc, *, chunk, vocab):
    k = pl.program_id(1)                       # vocab-tile index (reduction axis)
    tv = logits_ref.shape[-1]
    nchunks = tv // chunk                      # static

    @pl.when(k == 0)
    def _init():
        m_sc[...] = jnp.full_like(m_sc, -jnp.inf)
        l_sc[...] = jnp.zeros_like(l_sc)
        idx_sc[...] = jnp.zeros_like(idx_sc)
        g_sc[...] = jnp.zeros_like(g_sc)

    lab = labels_ref[...]                                          # (ts, 1) int32
    local_col = jax.lax.broadcasted_iota(jnp.int32, (1, chunk), 1)  # (1, chunk)

    # Chunked sweep over the streamed block: temporaries are bounded by `chunk`.
    @pl.loop(0, nchunks)
    def _chunk(c):
        start = pl.multiple_of(c * chunk, chunk)
        col0 = k * tv + c * chunk                                  # global column offset
        x_raw = logits_ref[:, pl.ds(start, chunk)]                 # native dtype (ts, chunk)
        valid = local_col < (vocab - col0)                         # mask OOB vocab tail
        x_raw = jnp.where(valid, x_raw, float("-inf"))             # stays in native dtype
        x = x_raw.astype(jnp.float32)

        # Label-logit gather: exactly one matching column across the whole vocab.
        is_lab = local_col == (lab - col0)                         # (ts, chunk) bool
        g_sc[...] += jnp.sum(jnp.where(is_lab, x, 0.0), axis=-1, keepdims=True)

        # Running argmax (native-dtype compares; first-occurrence semantics:
        # min index within a chunk, strict '>' across chunks/tiles).
        cmax_raw = jnp.max(x_raw, axis=-1, keepdims=True)          # (ts, 1) native
        in_idx = jnp.min(
            jnp.where(x_raw == cmax_raw, local_col, jnp.int32(2**31 - 1)),
            axis=-1, keepdims=True)
        cmax = cmax_raw.astype(jnp.float32)
        better = cmax > m_sc[...]
        idx_sc[...] = jnp.where(better, in_idx + col0, idx_sc[...])

        # Online logsumexp (f32 accumulators).  Guards keep NaNs out while a
        # row has only seen -inf (fully masked chunks).
        m_new = jnp.maximum(m_sc[...], cmax)
        still = m_new == -jnp.inf
        scale = jnp.where(still, 0.0, jnp.exp(m_sc[...] - m_new))
        csum = jnp.sum(jnp.exp(x - m_new), axis=-1, keepdims=True)
        l_sc[...] = l_sc[...] * scale + jnp.where(still, 0.0, csum)
        m_sc[...] = m_new

    @pl.when(k == pl.num_programs(1) - 1)
    def _finalize():
        lse_ref[...] = m_sc[...] + jnp.log(l_sc[...])
        pred_ref[...] = idx_sc[...]
        gold_ref[...] = g_sc[...]


def _pick_divisor_tile(dim, target, quantum):
    """Largest multiple of `quantum` dividing `dim`, <= target; None if impossible."""
    if dim % quantum != 0:
        return None
    top = min(dim, max(quantum, (target // quantum) * quantum))
    for cand in range(top, 0, -quantum):
        if dim % cand == 0:
            return cand
    return None


def lse_argmax_label_logit(logits, labels, *, block_bytes=8 * 1024 * 1024):
    """Per-row (logsumexp, argmax index, label logit) of an (S, V) logits matrix."""
    S, V = logits.shape
    itemsize = jnp.dtype(logits.dtype).itemsize
    sub_q = 8 * max(1, 4 // itemsize)             # sublane quantum: 8 f32 / 16 bf16
    labels2 = labels.reshape(S, 1).astype(jnp.int32)

    # ---- sequence (parallel) axis: tile always divides the (maybe padded) S.
    Sp = S
    ts = _pick_divisor_tile(S, 256, sub_q)
    if ts is None:
        if S <= 512:
            ts = S                                # full-extent row block (always legal)
        else:                                     # pathological S: pad rows once
            Sp = -(-S // 256) * 256
            logits = jnp.pad(logits, ((0, Sp - S), (0, 0)))
            labels2 = jnp.pad(labels2, ((0, Sp - S), (0, 0)), constant_values=-100)
            ts = 256
    elif S // ts < 2 and S >= 2 * sub_q:
        # >=2 row blocks so the "parallel" axis spans both v7x TensorCores.
        ts = _pick_divisor_tile(S, S // 2, sub_q) or ts

    # ---- vocab (reduction) axis: large streamed block, chunked inside kernel.
    tv_target = max(128, block_bytes // (ts * itemsize))
    if V <= 512:
        tv, chunk = V, V                          # full-extent block, single chunk
    else:
        tv = max(128, min((tv_target // 128) * 128, (V // 128) * 128))
        if tv >= 512:
            tv = (tv // 512) * 512
            chunk = 512
        else:
            chunk = tv
    grid = (Sp // ts, pl.cdiv(V, tv))             # OOB vocab tail masked in-kernel

    kernel = functools.partial(_lse_argmax_kernel, chunk=chunk, vocab=V)
    lse, pred, gold = pl.pallas_call(
        kernel,
        out_shape=(jax.ShapeDtypeStruct((Sp, 1), jnp.float32),
                   jax.ShapeDtypeStruct((Sp, 1), jnp.int32),
                   jax.ShapeDtypeStruct((Sp, 1), jnp.float32)),
        grid_spec=pltpu.PrefetchScalarGridSpec(
            num_scalar_prefetch=0,
            grid=grid,
            in_specs=[pl.BlockSpec((ts, 1), lambda i, k: (i, 0)),       # labels
                      pl.BlockSpec((ts, tv), lambda i, k: (i, k))],     # logits
            out_specs=[pl.BlockSpec((ts, 1), lambda i, k: (i, 0)),
                       pl.BlockSpec((ts, 1), lambda i, k: (i, 0)),
                       pl.BlockSpec((ts, 1), lambda i, k: (i, 0))],
            scratch_shapes=[pltpu.VMEM((ts, 1), jnp.float32),    # running max
                            pltpu.VMEM((ts, 1), jnp.float32),    # running sum-exp
                            pltpu.VMEM((ts, 1), jnp.int32),      # running argmax
                            pltpu.VMEM((ts, 1), jnp.float32)]),  # label logit
        compiler_params=pltpu.CompilerParams(
            dimension_semantics=("parallel", "arbitrary"),
            vmem_limit_bytes=48 * 1024 * 1024),
        cost_estimate=pl.CostEstimate(
            flops=8 * Sp * V,
            transcendentals=Sp * V,
            bytes_accessed=Sp * V * itemsize + 4 * Sp * 4),
    )(labels2, logits)
    return lse[:S, 0], pred[:S, 0], gold[:S, 0]


class CustomStyleLossPallas:
    """JAX/Pallas port of CustomStyleLoss.

    Phrase token-id lists are supplied directly (deterministic, in-script)
    instead of running a tokenizer.
    """

    def __init__(self, penalized_ids, rewarded_ids,
                 penalty_weight=0.5, reward_weight=0.5):
        self.penalized_ids = [list(map(int, p)) for p in penalized_ids]
        self.rewarded_ids = [list(map(int, p)) for p in rewarded_ids]
        self.penalty_weight = float(penalty_weight)
        self.reward_weight = float(reward_weight)
        self._fwd = jax.jit(self._forward)

    @staticmethod
    def _phrase_hits(pred, phrase_ids):
        """hits[t] = number of matched windows of `phrase_ids` covering t."""
        n = pred.shape[0]
        L = len(phrase_ids)
        if L == 0 or L > n:
            return jnp.zeros((n,), jnp.float32)
        phr = jnp.asarray(phrase_ids, dtype=pred.dtype)
        windows = jnp.stack([pred[j:n - L + 1 + j] for j in range(L)], axis=1)
        match = jnp.all(windows == phr[None, :], axis=1).astype(jnp.float32)
        match_full = jnp.zeros((n,), jnp.float32).at[:n - L + 1].set(match)
        hits = match_full
        for j in range(1, L):
            hits = hits + jnp.concatenate(
                [jnp.zeros((j,), jnp.float32), match_full[:n - j]])
        return hits

    def _forward(self, logits, labels):
        V = logits.shape[-1]
        logits2 = logits.reshape(-1, V)
        labels1 = labels.reshape(-1).astype(jnp.int32)

        lse, predicted, label_logit = lse_argmax_label_logit(logits2, labels1)

        # CrossEntropyLoss(reduction='none', ignore_index=-100): ignored -> 0.
        base_loss = jnp.where(labels1 == -100, 0.0, lse - label_logit)

        penalty = jnp.zeros_like(base_loss)
        reward = jnp.zeros_like(base_loss)
        for phrase in self.penalized_ids:
            penalty = penalty + self.penalty_weight * self._phrase_hits(predicted, phrase)
        for phrase in self.rewarded_ids:
            # Sign convention copied verbatim from the PyTorch module
            # (reward accumulates negative values, then `- reward` below).
            reward = reward - self.reward_weight * self._phrase_hits(predicted, phrase)

        final_loss = base_loss + penalty - reward
        # TODO(synk): wandb logging from the reference module has no Pallas equivalent; skipped.
        return jnp.mean(final_loss)

    def __call__(self, logits, labels):
        return self._fwd(logits, labels)


if __name__ == "__main__":
    S, V = 8, 256     # seq=8 tokens, vocab=256
    key = jax.random.PRNGKey(0)
    k1, k2 = jax.random.split(key)
    logits = jax.random.normal(k1, (S, V), dtype=jnp.float32)
    labels = jax.random.randint(k2, (S,), 0, V, dtype=jnp.int32)
    labels = labels.at[6].set(-100)   # exercise ignore_index handling

    # Make one penalized phrase ([5, 7] at positions 2..3) and one rewarded
    # phrase ([11] at position 5) actually fire in the argmax sequence.
    logits = logits.at[2, 5].add(20.0).at[3, 7].add(20.0).at[5, 11].add(20.0)

    loss_mod = CustomStyleLossPallas(
        penalized_ids=[[5, 7], [100, 101, 102]],
        rewarded_ids=[[11], [3, 4, 6]],
        penalty_weight=0.5, reward_weight=0.5)

    out = loss_mod(logits, labels)
    jax.block_until_ready(out)

    # ---- numpy reference (mirrors the PyTorch module) ----
    def reference(lg_np, lb_np):
        lg_np = np.asarray(lg_np, np.float32)
        lb_np = np.asarray(lb_np)
        S_, V_ = lg_np.shape
        m = lg_np.max(-1)
        lse_np = m + np.log(np.exp(lg_np - m[:, None]).sum(-1))
        safe = np.clip(lb_np, 0, V_ - 1)
        base = lse_np - lg_np[np.arange(S_), safe]
        base = np.where(lb_np == -100, 0.0, base)
        pred_np = lg_np.argmax(-1)
        pen = np.zeros(S_, np.float32)
        rew = np.zeros(S_, np.float32)
        for phrase in loss_mod.penalized_ids:
            L = len(phrase)
            for i in range(S_ - L + 1):
                if np.array_equal(pred_np[i:i + L], phrase):
                    pen[i:i + L] += loss_mod.penalty_weight
        for phrase in loss_mod.rewarded_ids:
            L = len(phrase)
            for i in range(S_ - L + 1):
                if np.array_equal(pred_np[i:i + L], phrase):
                    rew[i:i + L] -= loss_mod.reward_weight
        return float(np.mean(base + pen - rew))

    ref = reference(logits, labels)
    assert abs(float(out) - ref) < 1e-3, (float(out), ref)

    # bf16 streaming path (halves HBM bytes; kernel accumulates in f32).
    logits_bf16 = logits.astype(jnp.bfloat16)
    out_bf16 = loss_mod(logits_bf16, labels)
    jax.block_until_ready(out_bf16)
    ref_bf16 = reference(np.asarray(logits_bf16.astype(jnp.float32)), labels)
    assert abs(float(out_bf16) - ref_bf16) < 1e-2, (float(out_bf16), ref_bf16)

    print("KERNEL_OK")
</pallas_src>

<mosaic_0001>
module attributes {stable_mosaic.version = 11 : i64} {
  func.func @_lse_argmax_kernel(%arg0: i32, %arg1: i32, %arg2: memref<8x1xi32, #tpu.memory_space<vmem>>, %arg3: memref<8x256xf32, #tpu.memory_space<vmem>>, %arg4: memref<8x1xf32, #tpu.memory_space<vmem>>, %arg5: memref<8x1xi32, #tpu.memory_space<vmem>>, %arg6: memref<8x1xf32, #tpu.memory_space<vmem>>, %arg7: memref<8x1xf32, #tpu.memory_space<vmem>>, %arg8: memref<8x1xf32, #tpu.memory_space<vmem>>, %arg9: memref<8x1xi32, #tpu.memory_space<vmem>>, %arg10: memref<8x1xf32, #tpu.memory_space<vmem>>) attributes {dimension_semantics = [#tpu.dimension_semantics<parallel>, #tpu.dimension_semantics<arbitrary>], iteration_bounds = array<i64: 1, 1>, scalar_prefetch = 0 : i64, scratch_operands = 4 : i64, tpu.core_type = #tpu.core_type<tc>, window_params = [{transform_indices = @transform_0, window_bounds = array<i64: 8, 1>}, {transform_indices = @transform_1, window_bounds = array<i64: 8, 256>}, {transform_indices = @transform_2, window_bounds = array<i64: 8, 1>}, {transform_indices = @transform_3, window_bounds = array<i64: 8, 1>}, {transform_indices = @transform_4, window_bounds = array<i64: 8, 1>}]} {
    %c0_i32 = arith.constant 0 : i32
    %0 = arith.cmpi eq, %arg1, %c0_i32 : i32
    %1 = arith.extui %0 : i1 to i32
    %c0_i32_0 = arith.constant 0 : i32
    %2 = arith.cmpi ne, %1, %c0_i32_0 : i32
    scf.if %2 {
      %cst_39 = arith.constant 0xFF800000 : f32
      %74 = vector.broadcast %cst_39 : f32 to vector<8x1xf32>
      %c0_40 = arith.constant 0 : index
      %c0_41 = arith.constant 0 : index
      %75 = vector.load %arg7[%c0_40, %c0_41] : memref<8x1xf32, #tpu.memory_space<vmem>>, vector<8x1xf32>
      tpu.vector_store %arg7[%c0_40, %c0_41], %74 {strides = array<i32>} : memref<8x1xf32, #tpu.memory_space<vmem>>, vector<8x1xf32>,
      %cst_42 = arith.constant 0.000000e+00 : f32
      %76 = vector.broadcast %cst_42 : f32 to vector<8x1xf32>
      %c0_43 = arith.constant 0 : index
      %c0_44 = arith.constant 0 : index
      %77 = vector.load %arg8[%c0_43, %c0_44] : memref<8x1xf32, #tpu.memory_space<vmem>>, vector<8x1xf32>
      tpu.vector_store %arg8[%c0_43, %c0_44], %76 {strides = array<i32>} : memref<8x1xf32, #tpu.memory_space<vmem>>, vector<8x1xf32>,
      %c0_i32_45 = arith.constant 0 : i32
      %78 = vector.broadcast %c0_i32_45 : i32 to vector<8x1xi32>
      %c0_46 = arith.constant 0 : index
      %c0_47 = arith.constant 0 : index
      %79 = vector.load %arg9[%c0_46, %c0_47] : memref<8x1xi32, #tpu.memory_space<vmem>>, vector<8x1xi32>
      tpu.vector_store %arg9[%c0_46, %c0_47], %78 {strides = array<i32>} : memref<8x1xi32, #tpu.memory_space<vmem>>, vector<8x1xi32>,
      %cst_48 = arith.constant 0.000000e+00 : f32
      %80 = vector.broadcast %cst_48 : f32 to vector<8x1xf32>
      %c0_49 = arith.constant 0 : index
      %c0_50 = arith.constant 0 : index
      %81 = vector.load %arg10[%c0_49, %c0_50] : memref<8x1xf32, #tpu.memory_space<vmem>>, vector<8x1xf32>
      tpu.vector_store %arg10[%c0_49, %c0_50], %80 {strides = array<i32>} : memref<8x1xf32, #tpu.memory_space<vmem>>, vector<8x1xf32>,
    } else {
    }
    %c0 = arith.constant 0 : index
    %c0_1 = arith.constant 0 : index
    %3 = vector.load %arg2[%c0, %c0_1] : memref<8x1xi32, #tpu.memory_space<vmem>>, vector<8x1xi32>
    %4 = tpu.iota {dimensions = array<i32: 1>} : vector<1x256xi32>
    %c0_i32_2 = arith.constant 0 : i32
    %c1_i32 = arith.constant 1 : i32
    %5 = arith.muli %c0_i32_2, %c1_i32 : i32
    %c0_i32_3 = arith.constant 0 : i32
    %6 = arith.addi %c0_i32_3, %5 : i32
    %c256_i32 = arith.constant 256 : i32
    %7 = arith.muli %6, %c256_i32 : i32
    %8 = tpu.assume_multiple %7, 256 : i32
    %c256_i32_4 = arith.constant 256 : i32
    %9 = arith.muli %arg1, %c256_i32_4 : i32
    %c256_i32_5 = arith.constant 256 : i32
    %10 = arith.muli %6, %c256_i32_5 : i32
    %11 = arith.addi %9, %10 : i32
    %c0_6 = arith.constant 0 : index
    %12 = arith.index_cast %8 : i32 to index
    %13 = vector.load %arg3[%c0_6, %12] : memref<8x256xf32, #tpu.memory_space<vmem>>, vector<8x256xf32>
    %c256_i32_7 = arith.constant 256 : i32
    %14 = arith.subi %c256_i32_7, %11 : i32
    %15 = vector.broadcast %14 : i32 to vector<1x256xi32>
    %16 = arith.cmpi slt, %4, %15 : vector<1x256xi32>
    %cst = arith.constant 0xFF800000 : f32
    %17 = vector.shape_cast %16 : vector<1x256xi1> to vector<1x256xi1>
    %18 = vector.broadcast %17 : vector<1x256xi1> to vector<8x256xi1>
    %19 = vector.broadcast %cst : f32 to vector<8x256xf32>
    %20 = arith.select %18, %13, %19 : vector<8x256xi1>, vector<8x256xf32>
    %21 = vector.broadcast %11 : i32 to vector<8x1xi32>
    %22 = arith.subi %3, %21 : vector<8x1xi32>
    %23 = vector.broadcast %4 : vector<1x256xi32> to vector<8x256xi32>
    %24 = vector.broadcast %22 : vector<8x1xi32> to vector<8x256xi32>
    %25 = arith.cmpi eq, %23, %24 : vector<8x256xi32>
    %c0_8 = arith.constant 0 : index
    %c0_9 = arith.constant 0 : index
    %26 = vector.load %arg10[%c0_8, %c0_9] : memref<8x1xf32, #tpu.memory_space<vmem>>, vector<8x1xf32>
    %cst_10 = arith.constant 0.000000e+00 : f32
    %27 = vector.broadcast %cst_10 : f32 to vector<8x256xf32>
    %28 = arith.select %25, %20, %27 : vector<8x256xi1>, vector<8x256xf32>
    %cst_11 = arith.constant dense<0.000000e+00> : vector<8xf32>
    %29 = vector.multi_reduction <add>, %28, %cst_11 [1] : vector<8x256xf32> to vector<8xf32>
    %30 = vector.shape_cast %29 : vector<8xf32> to vector<8x1xf32>
    %31 = arith.addf %26, %30 : vector<8x1xf32>
    %c0_12 = arith.constant 0 : index
    %c0_13 = arith.constant 0 : index
    %32 = vector.load %arg10[%c0_12, %c0_13] : memref<8x1xf32, #tpu.memory_space<vmem>>, vector<8x1xf32>
    tpu.vector_store %arg10[%c0_12, %c0_13], %31 {strides = array<i32>} : memref<8x1xf32, #tpu.memory_space<vmem>>, vector<8x1xf32>,
    %cst_14 = arith.constant dense<0xFF800000> : vector<8xf32>
    %33 = vector.multi_reduction <maximumf>, %20, %cst_14 [1] : vector<8x256xf32> to vector<8xf32>
    %34 = vector.shape_cast %33 : vector<8xf32> to vector<8x1xf32>
    %35 = vector.broadcast %34 : vector<8x1xf32> to vector<8x256xf32>
    %36 = arith.cmpf oeq, %20, %35 : vector<8x256xf32>
    %c2147483647_i32 = arith.constant 2147483647 : i32
    %37 = vector.shape_cast %4 : vector<1x256xi32> to vector<1x256xi32>
    %38 = vector.broadcast %37 : vector<1x256xi32> to vector<8x256xi32>
    %39 = vector.broadcast %c2147483647_i32 : i32 to vector<8x256xi32>
    %40 = arith.select %36, %38, %39 : vector<8x256xi1>, vector<8x256xi32>
    %cst_15 = arith.constant dense<2147483647> : vector<8xi32>
    %41 = vector.multi_reduction <minsi>, %40, %cst_15 [1] : vector<8x256xi32> to vector<8xi32>
    %42 = vector.shape_cast %41 : vector<8xi32> to vector<8x1xi32>
    %c0_16 = arith.constant 0 : index
    %c0_17 = arith.constant 0 : index
    %43 = vector.load %arg7[%c0_16, %c0_17] : memref<8x1xf32, #tpu.memory_space<vmem>>, vector<8x1xf32>
    %44 = arith.cmpf ogt, %34, %43 : vector<8x1xf32>
    %45 = vector.broadcast %11 : i32 to vector<8x1xi32>
    %46 = arith.addi %42, %45 : vector<8x1xi32>
    %c0_18 = arith.constant 0 : index
    %c0_19 = arith.constant 0 : index
    %47 = vector.load %arg9[%c0_18, %c0_19] : memref<8x1xi32, #tpu.memory_space<vmem>>, vector<8x1xi32>
    %48 = arith.select %44, %46, %47 : vector<8x1xi1>, vector<8x1xi32>
    %c0_20 = arith.constant 0 : index
    %c0_21 = arith.constant 0 : index
    %49 = vector.load %arg9[%c0_20, %c0_21] : memref<8x1xi32, #tpu.memory_space<vmem>>, vector<8x1xi32>
    tpu.vector_store %arg9[%c0_20, %c0_21], %48 {strides = array<i32>} : memref<8x1xi32, #tpu.memory_space<vmem>>, vector<8x1xi32>,
    %c0_22 = arith.constant 0 : index
    %c0_23 = arith.constant 0 : index
    %50 = vector.load %arg7[%c0_22, %c0_23] : memref<8x1xf32, #tpu.memory_space<vmem>>, vector<8x1xf32>
    %51 = arith.maximumf %50, %34 : vector<8x1xf32>
    %cst_24 = arith.constant 0xFF800000 : f32
    %52 = vector.broadcast %cst_24 : f32 to vector<8x1xf32>
    %53 = arith.cmpf oeq, %51, %52 : vector<8x1xf32>
    %c0_25 = arith.constant 0 : index
    %c0_26 = arith.constant 0 : index
    %54 = vector.load %arg7[%c0_25, %c0_26] : memref<8x1xf32, #tpu.memory_space<vmem>>, vector<8x1xf32>
    %55 = arith.subf %54, %51 : vector<8x1xf32>
    %56 = math.exp %55 : vector<8x1xf32>
    %cst_27 = arith.constant 0.000000e+00 : f32
    %57 = vector.broadcast %cst_27 : f32 to vector<8x1xf32>
    %58 = arith.select %53, %57, %56 : vector<8x1xi1>, vector<8x1xf32>
    %59 = vector.broadcast %51 : vector<8x1xf32> to vector<8x256xf32>
    %60 = arith.subf %20, %59 : vector<8x256xf32>
    %61 = math.exp %60 : vector<8x256xf32>
    %cst_28 = arith.constant dense<0.000000e+00> : vector<8xf32>
    %62 = vector.multi_reduction <add>, %61, %cst_28 [1] : vector<8x256xf32> to vector<8xf32>
    %63 = vector.shape_cast %62 : vector<8xf32> to vector<8x1xf32>
    %c0_29 = arith.constant 0 : index
    %c0_30 = arith.constant 0 : index
    %64 = vector.load %arg8[%c0_29, %c0_30] : memref<8x1xf32, #tpu.memory_space<vmem>>, vector<8x1xf32>
    %65 = arith.mulf %64, %58 : vector<8x1xf32>
    %cst_31 = arith.constant 0.000000e+00 : f32
    %66 = vector.broadcast %cst_31 : f32 to vector<8x1xf32>
    %67 = arith.select %53, %66, %63 : vector<8x1xi1>, vector<8x1xf32>
    %68 = arith.addf %65, %67 : vector<8x1xf32>
    %c0_32 = arith.constant 0 : index
    %c0_33 = arith.constant 0 : index
    %69 = vector.load %arg8[%c0_32, %c0_33] : memref<8x1xf32, #tpu.memory_space<vmem>>, vector<8x1xf32>
    tpu.vector_store %arg8[%c0_32, %c0_33], %68 {strides = array<i32>} : memref<8x1xf32, #tpu.memory_space<vmem>>, vector<8x1xf32>,
    %c0_34 = arith.constant 0 : index
    %c0_35 = arith.constant 0 : index
    %70 = vector.load %arg7[%c0_34, %c0_35] : memref<8x1xf32, #tpu.memory_space<vmem>>, vector<8x1xf32>
    tpu.vector_store %arg7[%c0_34, %c0_35], %51 {strides = array<i32>} : memref<8x1xf32, #tpu.memory_space<vmem>>, vector<8x1xf32>,
    %c1_i32_36 = arith.constant 1 : i32
    %c0_i32_37 = arith.constant 0 : i32
    %71 = arith.cmpi eq, %arg1, %c0_i32_37 : i32
    %72 = arith.extui %71 : i1 to i32
    %c0_i32_38 = arith.constant 0 : i32
    %73 = arith.cmpi ne, %72, %c0_i32_38 : i32
    scf.if %73 {
      %c0_39 = arith.constant 0 : index
      %c0_40 = arith.constant 0 : index
      %74 = vector.load %arg7[%c0_39, %c0_40] : memref<8x1xf32, #tpu.memory_space<vmem>>, vector<8x1xf32>
      %c0_41 = arith.constant 0 : index
      %c0_42 = arith.constant 0 : index
      %75 = vector.load %arg8[%c0_41, %c0_42] : memref<8x1xf32, #tpu.memory_space<vmem>>, vector<8x1xf32>
      %76 = math.log %75 : vector<8x1xf32>
      %77 = arith.addf %74, %76 : vector<8x1xf32>
      %c0_43 = arith.constant 0 : index
      %c0_44 = arith.constant 0 : index
      %78 = vector.load %arg4[%c0_43, %c0_44] : memref<8x1xf32, #tpu.memory_space<vmem>>, vector<8x1xf32>
      tpu.vector_store %arg4[%c0_43, %c0_44], %77 {strides = array<i32>} : memref<8x1xf32, #tpu.memory_space<vmem>>, vector<8x1xf32>,
      %c0_45 = arith.constant 0 : index
      %c0_46 = arith.constant 0 : index
      %79 = vector.load %arg9[%c0_45, %c0_46] : memref<8x1xi32, #tpu.memory_space<vmem>>, vector<8x1xi32>
      %c0_47 = arith.constant 0 : index
      %c0_48 = arith.constant 0 : index
      %80 = vector.load %arg5[%c0_47, %c0_48] : memref<8x1xi32, #tpu.memory_space<vmem>>, vector<8x1xi32>
      tpu.vector_store %arg5[%c0_47, %c0_48], %79 {strides = array<i32>} : memref<8x1xi32, #tpu.memory_space<vmem>>, vector<8x1xi32>,
      %c0_49 = arith.constant 0 : index
      %c0_50 = arith.constant 0 : index
      %81 = vector.load %arg10[%c0_49, %c0_50] : memref<8x1xf32, #tpu.memory_space<vmem>>, vector<8x1xf32>
      %c0_51 = arith.constant 0 : index
      %c0_52 = arith.constant 0 : index
      %82 = vector.load %arg6[%c0_51, %c0_52] : memref<8x1xf32, #tpu.memory_space<vmem>>, vector<8x1xf32>
      tpu.vector_store %arg6[%c0_51, %c0_52], %81 {strides = array<i32>} : memref<8x1xf32, #tpu.memory_space<vmem>>, vector<8x1xf32>,
    } else {
    }
    return
  }
  func.func @transform_0(%arg0: i32, %arg1: i32) -> (i32, i32) {
    %c0_i32 = arith.constant 0 : i32
    %c0_i32_0 = arith.constant 0 : i32
    return %arg0, %c0_i32 : i32, i32
  }
  func.func @transform_1(%arg0: i32, %arg1: i32) -> (i32, i32) {
    %c0_i32 = arith.constant 0 : i32
    return %arg0, %arg1 : i32, i32
  }
  func.func @transform_2(%arg0: i32, %arg1: i32) -> (i32, i32) {
    %c0_i32 = arith.constant 0 : i32
    %c0_i32_0 = arith.constant 0 : i32
    return %arg0, %c0_i32 : i32, i32
  }
  func.func @transform_3(%arg0: i32, %arg1: i32) -> (i32, i32) {
    %c0_i32 = arith.constant 0 : i32
    %c0_i32_0 = arith.constant 0 : i32
    return %arg0, %c0_i32 : i32, i32
  }
  func.func @transform_4(%arg0: i32, %arg1: i32) -> (i32, i32) {
    %c0_i32 = arith.constant 0 : i32
    %c0_i32_0 = arith.constant 0 : i32
    return %arg0, %c0_i32 : i32, i32
  }
}

</mosaic_0001>

<llo_original>
// kernel: _forward.1
$region0: #{_forward.1}
  #allocation0 [shape = 'u32[]', space=smem, size = 0x4, offset = 0x4, fixed_abs, tag = 'smem constant byte address 0x4 - core index']
  #allocation1 [shape = 'u32[144,128]{1,0:T(1,128)}', space=vmem, size = 0x12000, scoped, tag = 'internal scratch']
  #allocation2 [shape = 'f32[8,1]{1,0:T(8,128)}', space=vmem, size = 0x1000, scoped, tag = 'scratch operand']
  #allocation3 [shape = 'f32[8,1]{1,0:T(8,128)}', space=vmem, size = 0x1000, scoped, tag = 'scratch operand']
  #allocation4 [shape = 's32[8,1]{1,0:T(8,128)}', space=vmem, size = 0x1000, scoped, tag = 'scratch operand']
  #allocation5 [shape = 'f32[8,1]{1,0:T(8,128)}', space=vmem, size = 0x1000, scoped, tag = 'scratch operand']
  %s0 = inlined_call_operand.vmem [shape: s32[8,1], index: 0, kind: input, shape index: {}]
  %s1 = inlined_call_operand.hbm [shape: f32[8,256], index: 1, kind: input, shape index: {}]
  %s2 = inlined_call_operand.vmem [shape: f32[8,1], index: 2, kind: output, shape index: {0}]
  %s3 = inlined_call_operand.vmem [shape: s32[8,1], index: 3, kind: output, shape index: {1}]
  %s4 = inlined_call_operand.vmem [shape: f32[8,1], index: 4, kind: output, shape index: {2}]
  %5 = xla_tuple %s2, %s3, %s4
  %s6 = sld [smem:[#allocation0]]
  $region46: #{_forward.1} parent=0
    _
  %s8 = ssub.s32 1, %s6
  %s9 = scalar_select 0, %s8, %s6
  $region1: #{_forward.1} parent=0
    #allocation6 [shape = 'u8[8192]{0}', space=vmem, size = 0x2000, scoped, tag = 'input window, operand 1, single buffered']
    #allocation7 [shape = 's32[1]{0}', space=sflag, size = 0x4, scoped, tag = 'scoped memory for _forward.1']
    %10 = vsyncpa [#allocation7], 0
    // Predicated region
    $region2: #{_forward.1} parent=1 // pred_check
      _
    $region3: #{_forward.1} parent=1 // pred_check_branch
      %12 = sbr.rel (0) target = $region5
    $region4: #{_forward.1} parent=1 // pred_region
      _
    $region5: #{_forward.1} parent=1 // pred_fallthru
      _
    // Predicated region
    $region6: #{_forward.1} parent=1 // pred_check
      _
    $region7: #{_forward.1} parent=1 // pred_check_branch
      %14 = sbr.rel (0) target = $region9
    $region8: #{_forward.1} parent=1 // pred_region
      %s16 = ssub.s32 256, 256
      %17 = vsyncadd [#allocation7], %s16
      %s19 = sshll.u32 [#allocation6], 4
      %s20 = int_to_ptr.vmem [resolvable:$true] %s19
      %22 = dma.hbm_to_vmem [thread:$0]  %s1, 256, %s20, [#allocation7]
    $region9: #{_forward.1} parent=1 // pred_fallthru
      _
    // Predicated region
    $region10: #{_forward.1} parent=1 // pred_check
      _
    $region11: #{_forward.1} parent=1 // pred_check_branch
      %24 = sbr.rel (0) target = $region13
    $region12: #{_forward.1} parent=1 // pred_region
      %25 = dma.done [#allocation7], 256
    $region13: #{_forward.1} parent=1 // pred_fallthru
      _
    %p26 = scmp.eq.s32.totalorder 0, 0
    // Predicated region
    $region14: #{_forward.1} parent=1 // pred_check
      %p27 = pneg %p26
    $region15: #{_forward.1} parent=1 // pred_check_branch
      %29 = sbr.rel (%p27) target = $region17
    $region16: #{_forward.1} parent=1 // pred_region
      %vm30 = vcmask 7168
      %31 = vst.msk [vmem:[#allocation2] sm:$0xff] %vm30, -inf
      %32 = vst.msk [vmem:[#allocation3] sm:$0xff] %vm30, 0.0
      %33 = vst.msk [vmem:[#allocation4] sm:$0xff] %vm30, 0
      %34 = vst.msk [vmem:[#allocation5] sm:$0xff] %vm30, 0.0
    $region17: #{_forward.1} parent=1 // pred_fallthru
      _
    %v35 = vld [vmem:[%s0] sm:$0xff]
    %v36 = vlaneseq
    %v37 = vand.u32 %v36, 127
    %v38 = vadd.s32 %v37, 128
    %s39 = smul.u32 0, 256
    %v40 = vld [vmem:[#allocation6] sm:$0xff]
    %v41 = vld [vmem:[#allocation6 + $0x8] sm:$0xff]
    %s42 = ssub.s32 256, %s39
    %v43 = vstv %s42
    %vm44 = vcmp.lt.s32.totalorder %v37, %v43
    %vm45 = vcmp.lt.s32.totalorder %v38, %v43
    %v46 = vsel %vm44, 1, 0
    %v47 = vsel %vm45, 1, 0
    %vm48 = vcmp.eq.s32.totalorder %v46, 1
    %vm49 = vcmp.eq.s32.totalorder %v47, 1
    %v50 = vsel %vm48, %v40, -inf
    %v51 = vsel %vm49, %v41, -inf
    %v52 = vstv %s39
    %v53 = vsub.s32 %v35, %v52
    %54 = vset.pattern.permute.xlu0 0
    %55 = vperm.xlu0 %54, %v53
    %v56 = vpop.permute.xlu0 %55
    %vm57 = vcmp.eq.s32.totalorder %v37, %v56
    %vm58 = vcmp.eq.s32.totalorder %v38, %v56
    %v59 = vld [vmem:[#allocation5] sm:$0xff]
    %v60 = vsel %vm57, %v50, 0.0
    %v61 = vsel %vm58, %v51, 0.0
    %v62 = vadd.f32 %v60, %v61
    %63 = vadd.xlane.f32.xlu0 %v62
    %v64 = vpop.xlane.xlu0 %63
    %v65 = vadd.f32 %v59, %v64
    %vm66 = vcmask 7168
    %67 = vst.msk [vmem:[#allocation5] sm:$0xff] %vm66, %v65
    %v68 = vmax.f32 %v50, %v51
    %69 = vmax.xlane.f32.xlu0 %v68
    %v70 = vpop.xlane.xlu0 %69
    %vm71 = vcmp.eq.f32.partialorder %v50, %v70
    %vm72 = vcmp.eq.f32.partialorder %v51, %v70
    %v73 = vsel %vm71, %v37, 2147483647
    %v74 = vsel %vm72, %v38, 2147483647
    %vm75 = vcmp.lt.s32.totalorder %v73, %v74
    %v76 = vsel %vm75, %v73, %v74
    %v77 = vand.u32 %v76, 65535
    %v78 = vshra.s32 %v76, 16
    %v79 = vcvt.s32.f32 %v77
    %v80 = vcvt.s32.f32 %v78
    %81 = vmin.xlane.f32.xlu0 %v80
    %v82 = vpop.xlane.xlu0 %81
    %vm83 = vcmp.eq.f32.partialorder %v80, %v82
    %v84 = vsel %vm83, %v79, inf
    %85 = vmin.xlane.f32.xlu0 %v84
    %v86 = vpop.xlane.xlu0 %85
    %v87 = vcvt.f32.s32 %v86
    %v88 = vcvt.f32.s32 %v82
    %v89 = vshll.u32 %v88, 16
    %v90 = vadd.s32 %v89, %v87
    %v91 = vld [vmem:[#allocation2] sm:$0xff]
    %vm92 = vcmp.gt.f32.partialorder %v70, %v91
    %v93 = vadd.s32 %v90, %v52
    %v94 = vld [vmem:[#allocation4] sm:$0xff]
    %v95 = vsel %vm92, %v93, %v94
    %96 = vst.msk [vmem:[#allocation4] sm:$0xff] %vm66, %v95
    %v97 = vld [vmem:[#allocation2] sm:$0xff]
    %v98 = vmax.f32 %v97, %v70
    %vm99 = vcmp.eq.f32.partialorder %v98, -inf
    %v100 = vsub.f32 %v97, %v98
    %v101 = vmul.f32 %v100, 1.442695
    %v102 = vpow.pop %v101
    %v103 = vsel %vm99, 0.0, %v102
    %105 = vset.pattern.permute.xlu0 0
    %106 = vperm.xlu0 %105, %v98
    %v107 = vpop.permute.xlu0 %106
    %v109 = vsub.f32 %v50, %v107
    %v110 = vsub.f32 %v51, %v107
    %v111 = vmul.f32 %v109, 1.442695
    %v112 = vpow.pop %v111
    %v113 = vmul.f32 %v110, 1.442695
    %v114 = vpow.pop %v113
    %v115 = vadd.f32 %v112, %v114
    %116 = vadd.xlane.f32.xlu0 %v115
    %v117 = vpop.xlane.xlu0 %116
    %v118 = vld [vmem:[#allocation3] sm:$0xff]
    %v119 = vmul.f32 %v118, %v103
    %v120 = vsel %vm99, 0.0, %v117
    %v121 = vadd.f32 %v119, %v120
    %122 = vst.msk [vmem:[#allocation3] sm:$0xff] %vm66, %v121
    %123 = vst.msk [vmem:[#allocation2] sm:$0xff] %vm66, %v98
    // Predicated region
    $region18: #{_forward.1} parent=1 // pred_check
      %p124 = pneg %p26
    $region19: #{_forward.1} parent=1 // pred_check_branch
      %126 = sbr.rel (%p124) target = $region21
    $region20: #{_forward.1} parent=1 // pred_region
      %v127 = vld [vmem:[#allocation2] sm:$0xff]
      %v128 = vld [vmem:[#allocation3] sm:$0xff]
      %v129 = vlog2.pop %v128
      %v130 = vmul.f32 %v129, 0.6931472
      %v131 = vadd.f32 %v127, %v130
      %132 = vst.msk [vmem:[%s2] sm:$0xff] %vm66, %v131
      %v133 = vld [vmem:[#allocation4] sm:$0xff]
      %134 = vst.msk [vmem:[%s3] sm:$0xff] %vm66, %v133
      %v135 = vld [vmem:[#allocation5] sm:$0xff]
      %136 = vst.msk [vmem:[%s4] sm:$0xff] %vm66, %v135
    $region21: #{_forward.1} parent=1 // pred_fallthru
      _
    // Predicated region
    $region22: #{_forward.1} parent=1 // pred_check
      _
    $region23: #{_forward.1} parent=1 // pred_check_branch
      %138 = sbr.rel (0) target = $region25
    $region24: #{_forward.1} parent=1 // pred_region
      _
    $region25: #{_forward.1} parent=1 // pred_fallthru
      _
    // Predicated region
    $region26: #{_forward.1} parent=1 // pred_check
      _
    $region27: #{_forward.1} parent=1 // pred_check_branch
      %140 = sbr.rel (0) target = $region29
    $region28: #{_forward.1} parent=1 // pred_region
      _
    $region29: #{_forward.1} parent=1 // pred_fallthru
      _
    // Predicated region
    $region30: #{_forward.1} parent=1 // pred_check
      _
    $region31: #{_forward.1} parent=1 // pred_check_branch
      %142 = sbr.rel (0) target = $region33
    $region32: #{_forward.1} parent=1 // pred_region
      _
    $region33: #{_forward.1} parent=1 // pred_fallthru
      _
    // Predicated region
    $region34: #{_forward.1} parent=1 // pred_check
      _
    $region35: #{_forward.1} parent=1 // pred_check_branch
      %144 = sbr.rel (0) target = $region37
    $region36: #{_forward.1} parent=1 // pred_region
      _
    $region37: #{_forward.1} parent=1 // pred_fallthru
      _
    // Predicated region
    $region38: #{_forward.1} parent=1 // pred_check
      _
    $region39: #{_forward.1} parent=1 // pred_check_branch
      %146 = sbr.rel (0) target = $region41
    $region40: #{_forward.1} parent=1 // pred_region
      _
    $region41: #{_forward.1} parent=1 // pred_fallthru
      _
    // Predicated region
    $region42: #{_forward.1} parent=1 // pred_check
      _
    $region43: #{_forward.1} parent=1 // pred_check_branch
      %148 = sbr.rel (0) target = $region45
    $region44: #{_forward.1} parent=1 // pred_region
      _
    $region45: #{_forward.1} parent=1 // pred_fallthru
      _
    %149 = vsyncpa [#allocation7], 1

</llo_original>
